<compile_context>
chip_gen: v7x
topology: tpu7x:2x2x1
jax: 0.10.0
libtpu: 0.0.40
codegen_flags: <defaults>
</compile_context>

<pallas_src>
import jax
import jax.numpy as jnp
from jax.experimental import pallas as pl
from jax.experimental.pallas import tpu as pltpu


# ----------------------------------------------------------------------------
# Parameter initialization (mirrors initialize_layer: orthogonal * std, zero bias).
# ----------------------------------------------------------------------------
def orthogonal_init(key, shape, std):
    """Orthogonal init (QR of a Gaussian), scaled by `std`. shape = (in, out)."""
    n_in, n_out = shape
    big = max(n_in, n_out)
    a = jax.random.normal(key, (big, big), dtype=jnp.float32)
    q, r = jnp.linalg.qr(a)
    s = jnp.sign(jnp.diag(r))
    s = jnp.where(s == 0, 1.0, s)            # guard against a zero diagonal entry
    q = q * s[None, :]
    return (std * q[:n_in, :n_out]).astype(jnp.float32)


def init_value_network_params(key, num_input, num_hidden):
    k1, k2, k3 = jax.random.split(key, 3)
    sqrt2 = float(jnp.sqrt(2.0))
    return {
        "w1": orthogonal_init(k1, (num_input, num_hidden), sqrt2),
        "b1": jnp.zeros((1, num_hidden), jnp.float32),
        "w2": orthogonal_init(k2, (num_hidden, num_hidden), sqrt2),
        "b2": jnp.zeros((1, num_hidden), jnp.float32),
        "w3": orthogonal_init(k3, (num_hidden, 1), 1.0),
        "b3": jnp.zeros((1, 1), jnp.float32),
    }


# ----------------------------------------------------------------------------
# Pallas kernel: fused MLP forward for one batch tile (batch on the lane axis).
# ----------------------------------------------------------------------------
def value_net_kernel(x_ref, w1t_ref, b1_ref, w2t_ref, b2_ref, w3_ref, b3_ref, o_ref):
    x = x_ref[...]                                                  # (tm, num_input) f32
    # Layer 1: (H, In) . (tm, In)^T -> (H, tm); batch moves to the lane axis.
    a1 = jax.lax.dot_general(
        w1t_ref[...], x,
        dimension_numbers=(((1,), (1,)), ((), ())),
        preferred_element_type=jnp.float32)
    h1 = jnp.tanh(a1 + b1_ref[...])                                 # (H, tm) f32
    # Layer 2: (H, H) . (H, tm) -> (H, tm).
    a2 = jnp.dot(w2t_ref[...], h1, preferred_element_type=jnp.float32)
    h2 = jnp.tanh(a2 + b2_ref[...])                                 # (H, tm) f32
    # Layer 3 (H -> 1): a N=1 matmul would waste the MXU -> VPU multiply by the
    # w3 column + XLU sublane reduction.  Result is a lane-dense (1, tm) row.
    o_ref[...] = jnp.sum(h2 * w3_ref[...], axis=0, keepdims=True) + b3_ref[...]


# ----------------------------------------------------------------------------
# Wrapper: tiling policy + layout plumbing.
# ----------------------------------------------------------------------------
_LANE = 128
_MAX_TILE = 32768                    # widest batch tile we will ever pick
_VMEM_BUDGET = 24 * 1024 * 1024      # per-TC budget (safe on v7x's 64 MiB VMEM)


def _round_up(x, m):
    return ((x + m - 1) // m) * m


def _max_batch_tile(num_input, num_hidden):
    """Largest batch tile (multiple of 128) whose VMEM footprint fits the budget."""
    # Resident f32 weights/biases (BlockSpec double-buffers them even though
    # their constant index_map means they are only DMA'd once).
    fixed = 2 * 4 * (num_input * num_hidden + num_hidden * num_hidden
                     + 3 * num_hidden + 1)
    # Per-batch-element bytes: x tile (2 bufs) + output row (2 bufs)
    # + headroom for the f32 (H, tm) activations / matmul results.
    per_elem = 2 * 4 * num_input + 2 * 4 + 3 * 4 * num_hidden
    tm = (_VMEM_BUDGET - fixed) // per_elem
    return max(_LANE, min(_MAX_TILE, (tm // _LANE) * _LANE))


def _choose_tiling(batch, num_input, num_hidden, batch_tile):
    if batch_tile is not None:
        tm = int(batch_tile)
        if batch > tm and tm % _LANE != 0:
            raise ValueError("batch_tile must be a multiple of 128 when it tiles the batch")
        return tm, tm * pl.cdiv(batch, tm)
    if batch <= _LANE:
        return batch, batch                        # single full-array block
    max_tm = _max_batch_tile(num_input, num_hidden)
    # >= 2 grid steps (target 4) so both v7x TensorCores get work and the x DMA
    # pipelines with compute; also keeps batch padding small.
    min_steps = min(4, pl.cdiv(batch, _LANE))
    n_tiles = max(pl.cdiv(batch, max_tm), min_steps)
    tm = _round_up(pl.cdiv(batch, n_tiles), _LANE)
    return tm, tm * pl.cdiv(batch, tm)


def value_network_forward(x, params, *, batch_tile=None):
    """x: (batch, num_input) float32 -> value: (batch, 1) float32."""
    batch, num_input = x.shape
    num_hidden = params["w1"].shape[1]
    x = x.astype(jnp.float32)

    tm, padded_batch = _choose_tiling(batch, num_input, num_hidden, batch_tile)
    grid = (padded_batch // tm,)

    if padded_batch != batch:
        # Only the ragged case pays a pad pass; padded rows are lane-local and
        # get sliced off below.
        x = jnp.pad(x, ((0, padded_batch - batch), (0, 0)))

    # Weights pre-transposed once so the batch lives on the lane axis of every
    # intermediate; biases / w3 as (H, 1) columns for lane-broadcast adds.
    w1t = params["w1"].T.astype(jnp.float32)                 # (H, num_input)
    w2t = params["w2"].T.astype(jnp.float32)                 # (H, H)
    b1c = params["b1"].reshape(num_hidden, 1).astype(jnp.float32)
    b2c = params["b2"].reshape(num_hidden, 1).astype(jnp.float32)
    w3c = params["w3"].reshape(num_hidden, 1).astype(jnp.float32)
    b3 = params["b3"].reshape(1, 1).astype(jnp.float32)

    # Constant index_map -> resident in VMEM, DMA'd once, never re-fetched.
    resident = lambda shape: pl.BlockSpec(shape, lambda i: (0,) * len(shape))

    out = pl.pallas_call(
        value_net_kernel,
        out_shape=jax.ShapeDtypeStruct((1, padded_batch), jnp.float32),
        grid=grid,
        in_specs=[
            pl.BlockSpec((tm, num_input), lambda i: (i, 0)),  # streamed x tile
            resident((num_hidden, num_input)),                # w1^T
            resident((num_hidden, 1)),                        # b1 column
            resident((num_hidden, num_hidden)),               # w2^T
            resident((num_hidden, 1)),                        # b2 column
            resident((num_hidden, 1)),                        # w3 column
            resident((1, 1)),                                 # b3
        ],
        out_specs=pl.BlockSpec((1, tm), lambda i: (0, i)),    # lane-dense values
        compiler_params=pltpu.CompilerParams(
            dimension_semantics=("parallel",),    # batch tiles -> both TCs on v7x
            vmem_limit_bytes=32 * 1024 * 1024,    # safe on v5e/v6e/v7x
        ),
    )(x, w1t, b1c, w2t, b2c, w3c, b3)

    return out[0, :batch].reshape(batch, 1)


# ----------------------------------------------------------------------------
# Pure-JAX reference (matches the PyTorch module's math).
# ----------------------------------------------------------------------------
def value_network_ref(x, params):
    h = jnp.tanh(x @ params["w1"] + params["b1"])
    h = jnp.tanh(h @ params["w2"] + params["b2"])
    return h @ params["w3"] + params["b3"]


if __name__ == "__main__":
    key = jax.random.PRNGKey(0)
    k_param, k_x1, k_x2 = jax.random.split(key, 3)

    num_input, num_hidden = 16, 32
    params = init_value_network_params(k_param, num_input, num_hidden)

    fwd = jax.jit(value_network_forward, static_argnames=("batch_tile",))

    # Case 1: tiny batch -> single full-array block (grid=(1,)).
    x_small = jax.random.normal(k_x1, (8, num_input), dtype=jnp.float32)
    v_small = jax.block_until_ready(fwd(x_small, params))
    assert v_small.shape == (8, 1)
    assert jnp.allclose(v_small, value_network_ref(x_small, params),
                        atol=1e-3, rtol=1e-3)

    # Case 2: ragged batch, default tiling -> multi-step "parallel" grid + padding.
    x_big = jax.random.normal(k_x2, (300, num_input), dtype=jnp.float32)
    v_big = jax.block_until_ready(fwd(x_big, params))
    assert v_big.shape == (300, 1)
    assert jnp.allclose(v_big, value_network_ref(x_big, params),
                        atol=1e-3, rtol=1e-3)

    # Case 3: explicit small tile -> exercises the user-specified tiling path.
    v_big2 = jax.block_until_ready(fwd(x_big, params, batch_tile=128))
    assert v_big2.shape == (300, 1)
    assert jnp.allclose(v_big2, value_network_ref(x_big, params),
                        atol=1e-3, rtol=1e-3)

    print("KERNEL_OK")
</pallas_src>

<mosaic_0001>
module attributes {stable_mosaic.version = 11 : i64} {
  func.func @value_net_kernel(%arg0: i32, %arg1: memref<8x16xf32, #tpu.memory_space<vmem>>, %arg2: memref<32x16xf32, #tpu.memory_space<vmem>>, %arg3: memref<32x1xf32, #tpu.memory_space<vmem>>, %arg4: memref<32x32xf32, #tpu.memory_space<vmem>>, %arg5: memref<32x1xf32, #tpu.memory_space<vmem>>, %arg6: memref<32x1xf32, #tpu.memory_space<vmem>>, %arg7: memref<1x1xf32, #tpu.memory_space<vmem>>, %arg8: memref<1x8xf32, #tpu.memory_space<vmem>>) attributes {dimension_semantics = [#tpu.dimension_semantics<parallel>], iteration_bounds = array<i64: 1>, scalar_prefetch = 0 : i64, scratch_operands = 0 : i64, tpu.core_type = #tpu.core_type<tc>, window_params = [{transform_indices = @transform_0, window_bounds = array<i64: 8, 16>}, {pipeline_mode = #tpu.pipeline_mode<synchronous>, transform_indices = @transform_1, window_bounds = array<i64: 32, 16>}, {pipeline_mode = #tpu.pipeline_mode<synchronous>, transform_indices = @transform_2, window_bounds = array<i64: 32, 1>}, {pipeline_mode = #tpu.pipeline_mode<synchronous>, transform_indices = @transform_3, window_bounds = array<i64: 32, 32>}, {pipeline_mode = #tpu.pipeline_mode<synchronous>, transform_indices = @transform_4, window_bounds = array<i64: 32, 1>}, {pipeline_mode = #tpu.pipeline_mode<synchronous>, transform_indices = @transform_5, window_bounds = array<i64: 32, 1>}, {pipeline_mode = #tpu.pipeline_mode<synchronous>, transform_indices = @transform_6, window_bounds = array<i64: 1, 1>}, {transform_indices = @transform_7, window_bounds = array<i64: 1, 8>}]} {
    %c0 = arith.constant 0 : index
    %c0_0 = arith.constant 0 : index
    %0 = vector.load %arg1[%c0, %c0_0] : memref<8x16xf32, #tpu.memory_space<vmem>>, vector<8x16xf32>
    %c0_1 = arith.constant 0 : index
    %c0_2 = arith.constant 0 : index
    %1 = vector.load %arg2[%c0_1, %c0_2] : memref<32x16xf32, #tpu.memory_space<vmem>>, vector<32x16xf32>
    %cst = arith.constant dense<0.000000e+00> : vector<32x8xf32>
    %2 = tpu.matmul %1, %0, %cst {dimension_numbers = #tpu.dot_dimension_numbers<[1], [1], [0], [0], [0, 0, 1, 0], [], []>} : vector<32x16xf32>, vector<8x16xf32>, vector<32x8xf32> -> vector<32x8xf32>
    %c0_3 = arith.constant 0 : index
    %c0_4 = arith.constant 0 : index
    %3 = vector.load %arg3[%c0_3, %c0_4] : memref<32x1xf32, #tpu.memory_space<vmem>>, vector<32x1xf32>
    %4 = vector.broadcast %3 : vector<32x1xf32> to vector<32x8xf32>
    %5 = arith.addf %2, %4 : vector<32x8xf32>
    %6 = math.tanh %5 : vector<32x8xf32>
    %c0_5 = arith.constant 0 : index
    %c0_6 = arith.constant 0 : index
    %7 = vector.load %arg4[%c0_5, %c0_6] : memref<32x32xf32, #tpu.memory_space<vmem>>, vector<32x32xf32>
    %cst_7 = arith.constant dense<0.000000e+00> : vector<32x8xf32>
    %8 = tpu.matmul %7, %6, %cst_7 {dimension_numbers = #tpu.dot_dimension_numbers<[1], [0], [0], [1], [0, 0, 1, 1], [], []>} : vector<32x32xf32>, vector<32x8xf32>, vector<32x8xf32> -> vector<32x8xf32>
    %c0_8 = arith.constant 0 : index
    %c0_9 = arith.constant 0 : index
    %9 = vector.load %arg5[%c0_8, %c0_9] : memref<32x1xf32, #tpu.memory_space<vmem>>, vector<32x1xf32>
    %10 = vector.broadcast %9 : vector<32x1xf32> to vector<32x8xf32>
    %11 = arith.addf %8, %10 : vector<32x8xf32>
    %12 = math.tanh %11 : vector<32x8xf32>
    %c0_10 = arith.constant 0 : index
    %c0_11 = arith.constant 0 : index
    %13 = vector.load %arg6[%c0_10, %c0_11] : memref<32x1xf32, #tpu.memory_space<vmem>>, vector<32x1xf32>
    %14 = vector.broadcast %13 : vector<32x1xf32> to vector<32x8xf32>
    %15 = arith.mulf %12, %14 : vector<32x8xf32>
    %cst_12 = arith.constant dense<0.000000e+00> : vector<8xf32>
    %16 = vector.multi_reduction <add>, %15, %cst_12 [0] : vector<32x8xf32> to vector<8xf32>
    %17 = vector.shape_cast %16 : vector<8xf32> to vector<1x8xf32>
    %c0_13 = arith.constant 0 : index
    %c0_14 = arith.constant 0 : index
    %18 = vector.load %arg7[%c0_13, %c0_14] : memref<1x1xf32, #tpu.memory_space<vmem>>, vector<1x1xf32>
    %19 = vector.broadcast %18 : vector<1x1xf32> to vector<1x8xf32>
    %20 = arith.addf %17, %19 : vector<1x8xf32>
    %c0_15 = arith.constant 0 : index
    %c0_16 = arith.constant 0 : index
    %21 = vector.load %arg8[%c0_15, %c0_16] : memref<1x8xf32, #tpu.memory_space<vmem>>, vector<1x8xf32>
    tpu.vector_store %arg8[%c0_15, %c0_16], %20 {strides = array<i32>} : memref<1x8xf32, #tpu.memory_space<vmem>>, vector<1x8xf32>,
    return
  }
  func.func @transform_0(%arg0: i32) -> (i32, i32) {
    %c0_i32 = arith.constant 0 : i32
    %c0_i32_0 = arith.constant 0 : i32
    return %arg0, %c0_i32 : i32, i32
  }
  func.func @transform_1(%arg0: i32) -> (i32, i32) {
    %c0_i32 = arith.constant 0 : i32
    %c0_i32_0 = arith.constant 0 : i32
    %c0_i32_1 = arith.constant 0 : i32
    return %c0_i32, %c0_i32_0 : i32, i32
  }
  func.func @transform_2(%arg0: i32) -> (i32, i32) {
    %c0_i32 = arith.constant 0 : i32
    %c0_i32_0 = arith.constant 0 : i32
    %c0_i32_1 = arith.constant 0 : i32
    return %c0_i32, %c0_i32_0 : i32, i32
  }
  func.func @transform_3(%arg0: i32) -> (i32, i32) {
    %c0_i32 = arith.constant 0 : i32
    %c0_i32_0 = arith.constant 0 : i32
    %c0_i32_1 = arith.constant 0 : i32
    return %c0_i32, %c0_i32_0 : i32, i32
  }
  func.func @transform_4(%arg0: i32) -> (i32, i32) {
    %c0_i32 = arith.constant 0 : i32
    %c0_i32_0 = arith.constant 0 : i32
    %c0_i32_1 = arith.constant 0 : i32
    return %c0_i32, %c0_i32_0 : i32, i32
  }
  func.func @transform_5(%arg0: i32) -> (i32, i32) {
    %c0_i32 = arith.constant 0 : i32
    %c0_i32_0 = arith.constant 0 : i32
    %c0_i32_1 = arith.constant 0 : i32
    return %c0_i32, %c0_i32_0 : i32, i32
  }
  func.func @transform_6(%arg0: i32) -> (i32, i32) {
    %c0_i32 = arith.constant 0 : i32
    %c0_i32_0 = arith.constant 0 : i32
    %c0_i32_1 = arith.constant 0 : i32
    return %c0_i32, %c0_i32_0 : i32, i32
  }
  func.func @transform_7(%arg0: i32) -> (i32, i32) {
    %c0_i32 = arith.constant 0 : i32
    %c0_i32_0 = arith.constant 0 : i32
    return %c0_i32, %arg0 : i32, i32
  }
}

</mosaic_0001>

<llo_original>
// kernel: value_network_forward.1
$region0: #{value_network_forward.1}
  #allocation0 [shape = 'u32[]', space=smem, size = 0x4, offset = 0x4, fixed_abs, tag = 'smem constant byte address 0x4 - core index']
  #allocation1 [shape = 'u32[144,128]{1,0:T(1,128)}', space=vmem, size = 0x12000, scoped, tag = 'internal scratch']
  #allocation2 [shape = 'f32[1,1]{1,0:T(1,128)S(1)}', space=vmem, size = 0x200, scoped, tag = 'scoped memory for value_network_forward.1']
  %s0 = inlined_call_operand.vmem [shape: f32[8,16], index: 0, kind: input, shape index: {}]
  %s1 = inlined_call_operand.vmem [shape: f32[32,16], index: 1, kind: input, shape index: {}]
  %s2 = inlined_call_operand.vmem [shape: f32[32,1], index: 2, kind: input, shape index: {}]
  %s3 = inlined_call_operand.vmem [shape: f32[32,32], index: 3, kind: input, shape index: {}]
  %s4 = inlined_call_operand.vmem [shape: f32[32,1], index: 4, kind: input, shape index: {}]
  %s5 = inlined_call_operand.vmem [shape: f32[32,1], index: 5, kind: input, shape index: {}]
  %s6 = inlined_call_operand.<no memory space> [shape: f32[1,1], index: 6, kind: input, shape index: {}]
  %s7 = inlined_call_operand.hbm [shape: f32[1,8], index: 7, kind: output, shape index: {}]
  %s8 = sld [smem:[#allocation0]]
  $region38: #{value_network_forward.1} parent=0
    _
  %s10 = ssub.s32 1, %s8
  %s11 = scalar_select 0, %s10, %s8
  %v12 = vstv %s6
  %13 = vst [vmem:[#allocation2] sm:$0x1] %v12
  $region1: #{value_network_forward.1} parent=0
    #allocation3 [shape = 'u8[512]{0}', space=vmem, size = 0x400, scoped, tag = 'output window, operand 0, single buffered']
    #allocation4 [shape = 's32[1]{0}', space=sflag, size = 0x4, scoped, tag = 'scoped memory for value_network_forward.1']
    %14 = vsyncpa [#allocation4], 0
    // Predicated region
    $region2: #{value_network_forward.1} parent=1 // pred_check
      _
    $region3: #{value_network_forward.1} parent=1 // pred_check_branch
      %16 = sbr.rel (0) target = $region5
    $region4: #{value_network_forward.1} parent=1 // pred_region
      _
    $region5: #{value_network_forward.1} parent=1 // pred_fallthru
      _
    // Predicated region
    $region6: #{value_network_forward.1} parent=1 // pred_check
      _
    $region7: #{value_network_forward.1} parent=1 // pred_check_branch
      %18 = sbr.rel (0) target = $region9
    $region8: #{value_network_forward.1} parent=1 // pred_region
      _
    $region9: #{value_network_forward.1} parent=1 // pred_fallthru
      _
    // Predicated region
    $region10: #{value_network_forward.1} parent=1 // pred_check
      _
    $region11: #{value_network_forward.1} parent=1 // pred_check_branch
      %20 = sbr.rel (0) target = $region13
    $region12: #{value_network_forward.1} parent=1 // pred_region
      _
    $region13: #{value_network_forward.1} parent=1 // pred_fallthru
      _
    // Predicated region
    $region14: #{value_network_forward.1} parent=1 // pred_check
      _
    $region15: #{value_network_forward.1} parent=1 // pred_check_branch
      %22 = sbr.rel (0) target = $region17
    $region16: #{value_network_forward.1} parent=1 // pred_region
      _
    $region17: #{value_network_forward.1} parent=1 // pred_fallthru
      _
    // Predicated region
    $region18: #{value_network_forward.1} parent=1 // pred_check
      _
    $region19: #{value_network_forward.1} parent=1 // pred_check_branch
      %24 = sbr.rel (0) target = $region21
    $region20: #{value_network_forward.1} parent=1 // pred_region
      _
    $region21: #{value_network_forward.1} parent=1 // pred_fallthru
      _
    // Predicated region
    $region22: #{value_network_forward.1} parent=1 // pred_check
      _
    $region23: #{value_network_forward.1} parent=1 // pred_check_branch
      %26 = sbr.rel (0) target = $region25
    $region24: #{value_network_forward.1} parent=1 // pred_region
      _
    $region25: #{value_network_forward.1} parent=1 // pred_fallthru
      _
    // Predicated region
    $region26: #{value_network_forward.1} parent=1 // pred_check
      _
    $region27: #{value_network_forward.1} parent=1 // pred_check_branch
      %28 = sbr.rel (0) target = $region29
    $region28: #{value_network_forward.1} parent=1 // pred_region
      _
    $region29: #{value_network_forward.1} parent=1 // pred_fallthru
      _
    %v29 = vld [vmem:[%s0] sm:$0xff]
    %v30 = vld [vmem:[%s1] sm:$0xff]
    %v31 = vld [vmem:[%s1 + $0x8] sm:$0xff]
    %v32 = vld [vmem:[%s1 + $0x10] sm:$0xff]
    %v33 = vld [vmem:[%s1 + $0x18] sm:$0xff]
    %v34 = vld [vmem:[%s2] sm:$0xff]
    %v35 = vld [vmem:[%s2 + $0x8] sm:$0xff]
    %v36 = vld [vmem:[%s2 + $0x10] sm:$0xff]
    %v37 = vld [vmem:[%s2 + $0x18] sm:$0xff]
    %39 = vset.pattern.permute.xlu0 0
    %40 = vperm.xlu0 %39, %v34
    %v41 = vpop.permute.xlu0 %40
    %44 = vset.pattern.permute.xlu0 0
    %45 = vperm.xlu0 %44, %v35
    %v46 = vpop.permute.xlu0 %45
    %49 = vset.pattern.permute.xlu0 0
    %50 = vperm.xlu0 %49, %v36
    %v51 = vpop.permute.xlu0 %50
    %54 = vset.pattern.permute.xlu0 0
    %55 = vperm.xlu0 %54, %v37
    %v56 = vpop.permute.xlu0 %55
    %vm58 = vcmask 130048
    %v60 = vsel %vm58, %v30, 0
    %v63 = vsel %vm58, %v31, 0
    %v66 = vsel %vm58, %v32, 0
    %v69 = vsel %vm58, %v33, 0
    %v72 = vsel %vm58, %v29, 0
    %74 = vmatprep.subr.mxu0 0.0
    %75 = vmatpush1.xpose.msra.mxu0 %v72
    %76 = vmatprep.subr.mxu0 0.0
    %77 = vmatpush1.xpose.msra.mxu0 0.0
    %78 = vmatprep.subr.mxu0 0.0
    %79 = vmatpush1.xpose.msra.mxu0 0.0
    %80 = vmatprep.subr.mxu0 0.0
    %81 = vmatpush1.xpose.msra.mxu0 0.0
    %82 = vmatprep.subr.mxu0 0.0
    %83 = vmatpush1.xpose.msra.mxu0 0.0
    %84 = vmatprep.subr.mxu0 0.0
    %85 = vmatpush1.xpose.msra.mxu0 0.0
    %86 = vmatprep.subr.mxu0 0.0
    %87 = vmatpush1.xpose.msra.mxu0 0.0
    %88 = vmatprep.subr.mxu0 0.0
    %89 = vmatpush1.xpose.msra.mxu0 0.0
    %90 = vmatprep.subr.mxu0 0.0
    %91 = vmatpush1.xpose.msra.mxu0 0.0
    %92 = vmatprep.subr.mxu0 0.0
    %93 = vmatpush1.xpose.msra.mxu0 0.0
    %94 = vmatprep.subr.mxu0 0.0
    %95 = vmatpush1.xpose.msra.mxu0 0.0
    %96 = vmatprep.subr.mxu0 0.0
    %97 = vmatpush1.xpose.msra.mxu0 0.0
    %98 = vmatprep.subr.mxu0 0.0
    %99 = vmatpush1.xpose.msra.mxu0 0.0
    %100 = vmatprep.subr.mxu0 0.0
    %101 = vmatpush1.xpose.msra.mxu0 0.0
    %102 = vmatprep.subr.mxu0 0.0
    %103 = vmatpush1.xpose.msra.mxu0 0.0
    %104 = vmatprep.subr.mxu0 0.0
    %105 = vmatpush1.xpose.msra.mxu0 0.0
    %106 = vmatprep.subr.mxu0 0.0
    %107 = vmatpush1.xpose.msra.mxu0 0.0
    %108 = vmatprep.subr.mxu0 0.0
    %109 = vmatpush1.xpose.msra.mxu0 0.0
    %110 = vmatprep.subr.mxu0 0.0
    %111 = vmatpush1.xpose.msra.mxu0 0.0
    %112 = vmatprep.subr.mxu0 0.0
    %113 = vmatpush1.xpose.msra.mxu0 0.0
    %114 = vmatprep.subr.mxu0 0.0
    %115 = vmatpush1.xpose.msra.mxu0 0.0
    %116 = vmatprep.subr.mxu0 0.0
    %117 = vmatpush1.xpose.msra.mxu0 0.0
    %118 = vmatprep.subr.mxu0 0.0
    %119 = vmatpush1.xpose.msra.mxu0 0.0
    %120 = vmatprep.subr.mxu0 0.0
    %121 = vmatpush1.xpose.msra.mxu0 0.0
    %122 = vmatprep.subr.mxu0 0.0
    %123 = vmatpush1.xpose.msra.mxu0 0.0
    %124 = vmatprep.subr.mxu0 0.0
    %125 = vmatpush1.xpose.msra.mxu0 0.0
    %126 = vmatprep.subr.mxu0 0.0
    %127 = vmatpush1.xpose.msra.mxu0 0.0
    %128 = vmatprep.subr.mxu0 0.0
    %129 = vmatpush1.xpose.msra.mxu0 0.0
    %130 = vmatprep.subr.mxu0 0.0
    %131 = vmatpush1.xpose.msra.mxu0 0.0
    %132 = vmatprep.subr.mxu0 0.0
    %133 = vmatpush1.xpose.msra.mxu0 0.0
    %134 = vmatprep.subr.mxu0 0.0
    %135 = vmatpush1.xpose.msra.mxu0 0.0
    %136 = vmatprep.subr.mxu0 0.0
    %137 = vmatpush1.xpose.msra.mxu0 0.0
    %138 = vmatprep.mubr.f32.mxu0 0.0
    %139 = vmatmul.mubr.f32.gmra.mrb[0].mxu0 %v60
    %v140 = vpop.f32.mrb[0].mxu0
    %v141 = vadd.f32 %v41, %v140
    %v142 = vpop.f32.mrb[0].mxu0
    %143 = vmatprep.mubr.f32.mxu0 0.0
    %144 = vmatmul.mubr.f32.gmra.mrb[0].mxu0 %v63
    %v145 = vpop.f32.mrb[0].mxu0
    %v146 = vadd.f32 %v46, %v145
    %v147 = vpop.f32.mrb[0].mxu0
    %148 = vmatprep.mubr.f32.mxu0 0.0
    %149 = vmatmul.mubr.f32.gmra.mrb[0].mxu0 %v66
    %v150 = vpop.f32.mrb[0].mxu0
    %v151 = vadd.f32 %v51, %v150
    %v152 = vpop.f32.mrb[0].mxu0
    %153 = vmatprep.mubr.f32.mxu0 0.0
    %154 = vmatmul.mubr.f32.gmra.mrb[0].mxu0 %v69
    %v155 = vpop.f32.mrb[0].mxu0
    %v156 = vadd.f32 %v56, %v155
    %v157 = vpop.f32.mrb[0].mxu0
    %158 = vdwg.mxu0
    %v159 = vtanh.pop %v141
    %v160 = vtanh.pop %v146
    %v161 = vtanh.pop %v151
    %v162 = vtanh.pop %v156
    %v163 = vld [vmem:[%s3] sm:$0xff]
    %v164 = vld [vmem:[%s3 + $0x8] sm:$0xff]
    %v165 = vld [vmem:[%s3 + $0x10] sm:$0xff]
    %v166 = vld [vmem:[%s3 + $0x18] sm:$0xff]
    %v167 = vld [vmem:[%s4] sm:$0xff]
    %v168 = vld [vmem:[%s4 + $0x8] sm:$0xff]
    %v169 = vld [vmem:[%s4 + $0x10] sm:$0xff]
    %v170 = vld [vmem:[%s4 + $0x18] sm:$0xff]
    %172 = vset.pattern.permute.xlu0 0
    %173 = vperm.xlu0 %172, %v167
    %v174 = vpop.permute.xlu0 %173
    %177 = vset.pattern.permute.xlu0 0
    %178 = vperm.xlu0 %177, %v168
    %v179 = vpop.permute.xlu0 %178
    %182 = vset.pattern.permute.xlu0 0
    %183 = vperm.xlu0 %182, %v169
    %v184 = vpop.permute.xlu0 %183
    %187 = vset.pattern.permute.xlu0 0
    %188 = vperm.xlu0 %187, %v170
    %v189 = vpop.permute.xlu0 %188
    %vm191 = vcmask 261120
    %v193 = vsel %vm191, %v163, 0
    %v196 = vsel %vm191, %v164, 0
    %v199 = vsel %vm191, %v165, 0
    %v202 = vsel %vm191, %v166, 0
    %204 = vmatprep.subr.mxu0 0.0
    %205 = vmatpush1.msra.mxu0 %v159
    %206 = vmatprep.subr.mxu0 0.0
    %207 = vmatpush1.msra.mxu0 %v160
    %208 = vmatprep.subr.mxu0 0.0
    %209 = vmatpush1.msra.mxu0 %v161
    %210 = vmatprep.subr.mxu0 0.0
    %211 = vmatpush1.msra.mxu0 %v162
    %212 = vmatprep.subr.mxu0 0.0
    %213 = vmatpush1.msra.mxu0 0.0
    %214 = vmatprep.subr.mxu0 0.0
    %215 = vmatpush1.msra.mxu0 0.0
    %216 = vmatprep.subr.mxu0 0.0
    %217 = vmatpush1.msra.mxu0 0.0
    %218 = vmatprep.subr.mxu0 0.0
    %219 = vmatpush1.msra.mxu0 0.0
    %220 = vmatprep.subr.mxu0 0.0
    %221 = vmatpush1.msra.mxu0 0.0
    %222 = vmatprep.subr.mxu0 0.0
    %223 = vmatpush1.msra.mxu0 0.0
    %224 = vmatprep.subr.mxu0 0.0
    %225 = vmatpush1.msra.mxu0 0.0
    %226 = vmatprep.subr.mxu0 0.0
    %227 = vmatpush1.msra.mxu0 0.0
    %228 = vmatprep.subr.mxu0 0.0
    %229 = vmatpush1.msra.mxu0 0.0
    %230 = vmatprep.subr.mxu0 0.0
    %231 = vmatpush1.msra.mxu0 0.0
    %232 = vmatprep.subr.mxu0 0.0
    %233 = vmatpush1.msra.mxu0 0.0
    %234 = vmatprep.subr.mxu0 0.0
    %235 = vmatpush1.msra.mxu0 0.0
    %236 = vmatprep.subr.mxu0 0.0
    %237 = vmatpush1.msra.mxu0 0.0
    %238 = vmatprep.subr.mxu0 0.0
    %239 = vmatpush1.msra.mxu0 0.0
    %240 = vmatprep.subr.mxu0 0.0
    %241 = vmatpush1.msra.mxu0 0.0
    %242 = vmatprep.subr.mxu0 0.0
    %243 = vmatpush1.msra.mxu0 0.0
    %244 = vmatprep.subr.mxu0 0.0
    %245 = vmatpush1.msra.mxu0 0.0
    %246 = vmatprep.subr.mxu0 0.0
    %247 = vmatpush1.msra.mxu0 0.0
    %248 = vmatprep.subr.mxu0 0.0
    %249 = vmatpush1.msra.mxu0 0.0
    %250 = vmatprep.subr.mxu0 0.0
    %251 = vmatpush1.msra.mxu0 0.0
    %252 = vmatprep.subr.mxu0 0.0
    %253 = vmatpush1.msra.mxu0 0.0
    %254 = vmatprep.subr.mxu0 0.0
    %255 = vmatpush1.msra.mxu0 0.0
    %256 = vmatprep.subr.mxu0 0.0
    %257 = vmatpush1.msra.mxu0 0.0
    %258 = vmatprep.subr.mxu0 0.0
    %259 = vmatpush1.msra.mxu0 0.0
    %260 = vmatprep.subr.mxu0 0.0
    %261 = vmatpush1.msra.mxu0 0.0
    %262 = vmatprep.subr.mxu0 0.0
    %263 = vmatpush1.msra.mxu0 0.0
    %264 = vmatprep.subr.mxu0 0.0
    %265 = vmatpush1.msra.mxu0 0.0
    %266 = vmatprep.subr.mxu0 0.0
    %267 = vmatpush1.msra.mxu0 0.0
    %268 = vmatprep.mubr.f32.mxu0 0.0
    %269 = vmatmul.mubr.f32.gmra.mrb[0].mxu0 %v193
    %v270 = vpop.f32.mrb[0].mxu0
    %v271 = vadd.f32 %v174, %v270
    %v272 = vpop.f32.mrb[0].mxu0
    %273 = vmatprep.mubr.f32.mxu0 0.0
    %274 = vmatmul.mubr.f32.gmra.mrb[0].mxu0 %v196
    %v275 = vpop.f32.mrb[0].mxu0
    %v276 = vadd.f32 %v179, %v275
    %v277 = vpop.f32.mrb[0].mxu0
    %278 = vmatprep.mubr.f32.mxu0 0.0
    %279 = vmatmul.mubr.f32.gmra.mrb[0].mxu0 %v199
    %v280 = vpop.f32.mrb[0].mxu0
    %v281 = vadd.f32 %v184, %v280
    %v282 = vpop.f32.mrb[0].mxu0
    %283 = vmatprep.mubr.f32.mxu0 0.0
    %284 = vmatmul.mubr.f32.gmra.mrb[0].mxu0 %v202
    %v285 = vpop.f32.mrb[0].mxu0
    %v286 = vadd.f32 %v189, %v285
    %v287 = vpop.f32.mrb[0].mxu0
    %288 = vdwg.mxu0
    %v289 = vtanh.pop %v271
    %v290 = vtanh.pop %v276
    %v291 = vtanh.pop %v281
    %v292 = vtanh.pop %v286
    %v293 = vld [vmem:[%s5] sm:$0xff]
    %v294 = vld [vmem:[%s5 + $0x8] sm:$0xff]
    %v295 = vld [vmem:[%s5 + $0x10] sm:$0xff]
    %v296 = vld [vmem:[%s5 + $0x18] sm:$0xff]
    %298 = vset.pattern.permute.xlu0 0
    %299 = vperm.xlu0 %298, %v293
    %v300 = vpop.permute.xlu0 %299
    %303 = vset.pattern.permute.xlu0 0
    %304 = vperm.xlu0 %303, %v294
    %v305 = vpop.permute.xlu0 %304
    %308 = vset.pattern.permute.xlu0 0
    %309 = vperm.xlu0 %308, %v295
    %v310 = vpop.permute.xlu0 %309
    %313 = vset.pattern.permute.xlu0 0
    %314 = vperm.xlu0 %313, %v296
    %v315 = vpop.permute.xlu0 %314
    %v317 = vmul.f32 %v289, %v300
    %v318 = vmul.f32 %v290, %v305
    %v319 = vmul.f32 %v291, %v310
    %v320 = vmul.f32 %v292, %v315
    %vm321 = vcmask 64512
    %v322 = vsel %vm321, %v317, 0.0
    %v323 = vsel %vm321, %v318, 0.0
    %v324 = vadd.f32 %v322, %v323
    %v325 = vsel %vm321, %v319, 0.0
    %v326 = vadd.f32 %v324, %v325
    %v327 = vsel %vm321, %v320, 0.0
    %v328 = vadd.f32 %v326, %v327
    %v329 = vrot.slane %v328, 4
    %v330 = vadd.f32 %v328, %v329
    %v331 = vrot.slane %v330, 2
    %v332 = vadd.f32 %v330, %v331
    %v333 = vrot.slane %v332, 1
    %v334 = vadd.f32 %v332, %v333
    %v335 = vld [vmem:[#allocation2] sm:$0x1]
    %337 = vset.pattern.permute.xlu0 0
    %338 = vperm.xlu0 %337, %v335
    %v339 = vpop.permute.xlu0 %338
    %v341 = vlaneseq
    %v342 = vshrl.u32 %v341, 7
    %v343 = vsub.s32 0, %v342
    %v344 = vrot.slane %v339, %v343
    %v345 = vadd.f32 %v334, %v344
    %vm346 = vcmask 57344
    %347 = vst.msk [vmem:[#allocation3] sm:$0x1] %vm346, %v345
    // Predicated region
    $region30: #{value_network_forward.1} parent=1 // pred_check
      _
    $region31: #{value_network_forward.1} parent=1 // pred_check_branch
      %349 = sbr.rel (0) target = $region33
    $region32: #{value_network_forward.1} parent=1 // pred_region
      %s351 = ssub.s32 16, 16
      %352 = vsyncadd [#allocation4], %s351
      %s354 = sshll.u32 [#allocation3], 4
      %s355 = int_to_ptr.vmem [resolvable:$true] %s354
      %357 = dma.vmem_to_hbm [thread:$0]  %s355, 16, %s7, [#allocation4]
    $region33: #{value_network_forward.1} parent=1 // pred_fallthru
      _
    // Predicated region
    $region34: #{value_network_forward.1} parent=1 // pred_check
      _
    $region35: #{value_network_forward.1} parent=1 // pred_check_branch
      %359 = sbr.rel (0) target = $region37
    $region36: #{value_network_forward.1} parent=1 // pred_region
      %360 = dma.done [#allocation4], 16
    $region37: #{value_network_forward.1} parent=1 // pred_fallthru
      _
    %361 = vsyncpa [#allocation4], 1

</llo_original>
